<compile_context>
chip_gen: v7x
topology: tpu7x:2x2x1
jax: 0.10.0
libtpu: 0.0.40
codegen_flags: <defaults>
</compile_context>

<pallas_src>
import math

import jax
import jax.numpy as jnp
from jax.experimental import pallas as pl
from jax.experimental.pallas import tpu as pltpu


def _round_up(x, m):
    return (x + m - 1) // m * m


def _pad2d(a, rows, cols):
    r, c = a.shape
    if r == rows and c == cols:
        return a
    return jnp.pad(a, ((0, rows - r), (0, cols - c)))


# ----------------------------------------------------------------------------
# Pallas kernel: sampled-weight matmul (the conv hot path)
# ----------------------------------------------------------------------------
def _bayes_conv_kernel(patches_ref, wmean_ref, wlogsig_ref, eps_w_ref,
                       bmean_ref, blogsig_ref, eps_b_ref, out_ref,
                       w_s, b_s):
    i = pl.program_id(1)          # M-tile index (innermost, "arbitrary") axis

    @pl.when(i == 0)
    def _sample():
        # Sample once per N-tile; weight blocks are resident across the M axis.
        # Math in f32 (VPU + EUP), result cached in VMEM scratch (compute dtype).
        w = wmean_ref[...] + jnp.exp(wlogsig_ref[...]) * eps_w_ref[...]
        w_s[...] = w.astype(w_s.dtype)
        b_s[...] = bmean_ref[...] + jnp.exp(blogsig_ref[...]) * eps_b_ref[...]

    # im2col matmul on the MXU (bf16 x bf16 -> f32 accumulate by default).
    acc = jnp.dot(patches_ref[...], w_s[...],
                  preferred_element_type=jnp.float32)
    out_ref[...] = (acc + b_s[...]).astype(out_ref.dtype)


def _bayes_conv_matmul(patches, w_mean, w_logsig, eps_w,
                       b_mean, b_logsig, eps_b,
                       *, compute_dtype=jnp.bfloat16, tm_max=512):
    """patches: (M, K_pad) compute_dtype; w_*: (K_pad, N_pad) f32;
    b_*: (1, N_pad) f32  ->  (M, N_pad) f32."""
    M, K_pad = patches.shape
    N_pad = w_mean.shape[1]

    tn = 256 if N_pad % 256 == 0 else 128          # lane-dense output tiles
    tm = min(tm_max, _round_up(M, 128))            # big row tiles (HBM roofline)
    M_pad = _round_up(M, tm)
    if M_pad != M:
        patches = jnp.pad(patches, ((0, M_pad - M), (0, 0)))

    grid = (N_pad // tn, M_pad // tm)              # (j over N, i over M); i fastest

    out = pl.pallas_call(
        _bayes_conv_kernel,
        out_shape=jax.ShapeDtypeStruct((M_pad, N_pad), jnp.float32),
        grid_spec=pltpu.PrefetchScalarGridSpec(
            num_scalar_prefetch=0,
            grid=grid,
            in_specs=[
                pl.BlockSpec((tm, K_pad), lambda j, i: (i, 0)),   # patch stream
                pl.BlockSpec((K_pad, tn), lambda j, i: (0, j)),   # w mean (resident per j)
                pl.BlockSpec((K_pad, tn), lambda j, i: (0, j)),   # w log sigma
                pl.BlockSpec((K_pad, tn), lambda j, i: (0, j)),   # w eps
                pl.BlockSpec((1, tn), lambda j, i: (0, j)),       # b mean
                pl.BlockSpec((1, tn), lambda j, i: (0, j)),       # b log sigma
                pl.BlockSpec((1, tn), lambda j, i: (0, j)),       # b eps
            ],
            out_specs=pl.BlockSpec((tm, tn), lambda j, i: (i, j)),
            scratch_shapes=[
                pltpu.VMEM((K_pad, tn), compute_dtype),   # cached sampled W
                pltpu.VMEM((1, tn), jnp.float32),         # cached sampled bias
            ],
        ),
        compiler_params=pltpu.CompilerParams(
            dimension_semantics=("parallel", "arbitrary"),
            vmem_limit_bytes=64 * 1024 * 1024),
    )(patches, w_mean, w_logsig, eps_w, b_mean, b_logsig, eps_b)
    return out[:M]


# ----------------------------------------------------------------------------
# Module-equivalent wrapper
# ----------------------------------------------------------------------------
class BayesianConv2dFlipoutPallas:
    def __init__(self, in_channels, out_channels, kernel_size,
                 stride=1, padding=0, prior_sigma=1.0, key=None):
        self.in_channels = in_channels
        self.out_channels = out_channels
        self.kernel_size = kernel_size
        self.stride = stride
        self.padding = padding
        self.prior_sigma = prior_sigma

        if key is None:
            key = jax.random.PRNGKey(0)
        # xavier_uniform_ (matches nn.init.xavier_uniform_).
        fan_in = in_channels * kernel_size * kernel_size
        fan_out = out_channels * kernel_size * kernel_size
        bound = math.sqrt(6.0 / (fan_in + fan_out))
        wshape = (out_channels, in_channels, kernel_size, kernel_size)
        self.weights_mean = jax.random.uniform(
            key, wshape, jnp.float32, minval=-bound, maxval=bound)
        self.log_weights_sigma = jnp.full(wshape, -3.0, jnp.float32)
        self.bias_mean = jnp.zeros((out_channels,), jnp.float32)
        self.log_bias_sigma = jnp.full((out_channels,), -3.0, jnp.float32)

    def forward(self, x, stochastic=True, key=None, compute_dtype=jnp.bfloat16):
        """x: (B, Cin, H, W) float32 -> (B, Cout, OH, OW) float32."""
        Cout, Cin, KH, KW = self.weights_mean.shape
        K = Cin * KH * KW
        B, _, H, W = x.shape

        if stochastic:
            if key is None:
                key = jax.random.PRNGKey(1)   # TODO(synk): thread a real key in training
            kw_key, kb_key = jax.random.split(key)
            eps_w = jax.random.normal(kw_key, self.weights_mean.shape, jnp.float32)
            eps_b = jax.random.normal(kb_key, self.bias_mean.shape, jnp.float32)
        else:
            eps_w = jnp.zeros_like(self.weights_mean)
            eps_b = jnp.zeros_like(self.bias_mean)

        # Zero-pad K and Cout to multiples of 128 (lane-dense loads/stores,
        # full MXU feed).  Padded weight rows/cols sample to exactly zero.
        K_pad = _round_up(K, 128)
        N_pad = _round_up(Cout, 128)

        def to_kn(a):   # (Cout, Cin, KH, KW) -> (K_pad, N_pad), reduction-major
            return _pad2d(a.reshape(Cout, K).T, K_pad, N_pad)

        w_mean = to_kn(self.weights_mean)
        w_logsig = to_kn(self.log_weights_sigma)
        eps_w_kn = to_kn(eps_w)
        b_mean = _pad2d(self.bias_mean.reshape(1, Cout), 1, N_pad)
        b_logsig = _pad2d(self.log_bias_sigma.reshape(1, Cout), 1, N_pad)
        eps_b_1n = _pad2d(eps_b.reshape(1, Cout), 1, N_pad)

        # im2col via identity-kernel conv; feature order (Cin, KH, KW) matches
        # the flattened PyTorch weight.  Cast to the matmul dtype first so the
        # materialized patch tensor is half-width in the bf16 path.
        # TODO(synk): fully fuse im2col into the kernel (shifted-matmul
        # decomposition) to remove the KH*KW-inflated HBM round trip.
        patches = jax.lax.conv_general_dilated_patches(
            x.astype(compute_dtype),
            filter_shape=(KH, KW),
            window_strides=(self.stride, self.stride),
            padding=[(self.padding, self.padding)] * 2,
            dimension_numbers=("NCHW", "OIHW", "NHWC"),
            precision=jax.lax.Precision.HIGHEST)
        OH = (H + 2 * self.padding - KH) // self.stride + 1
        OW = (W + 2 * self.padding - KW) // self.stride + 1
        patches = patches.reshape(B * OH * OW, K)
        if K_pad != K:
            patches = jnp.pad(patches, ((0, 0), (0, K_pad - K)))

        out = _bayes_conv_matmul(patches, w_mean, w_logsig, eps_w_kn,
                                 b_mean, b_logsig, eps_b_1n,
                                 compute_dtype=compute_dtype)
        out = out[:, :Cout].reshape(B, OH, OW, Cout)
        # TODO(synk): return NHWC directly when the consumer accepts it; the
        # transpose below only exists to match the PyTorch module's NCHW output.
        return jnp.transpose(out, (0, 3, 1, 2))

    def kl_loss(self):
        # Training-time scalar reduction; plain JAX glue (matches the spec's formula).
        def kl(mean, log_sigma, prior_sigma):
            sigma = jnp.exp(log_sigma)
            prior_var = prior_sigma ** 2
            post_var = sigma ** 2
            k = 0.5 * (post_var / prior_var + mean ** 2 / prior_var - 1.0
                       + 2.0 * log_sigma - 2.0 * jnp.log(prior_sigma))
            return jnp.sum(k)
        p = jnp.float32(self.prior_sigma)
        return (kl(self.weights_mean, self.log_weights_sigma, p)
                + kl(self.bias_mean, self.log_bias_sigma, p))


# ----------------------------------------------------------------------------
# Main: deterministic small-shape test vs. lax reference
# ----------------------------------------------------------------------------
if __name__ == "__main__":
    key = jax.random.PRNGKey(0)
    kx, kp, ke = jax.random.split(key, 3)

    B, Cin, H, W = 2, 4, 16, 16
    Cout, ksize, stride, padding = 8, 3, 1, 1

    x = jax.random.normal(kx, (B, Cin, H, W), jnp.float32)

    layer = BayesianConv2dFlipoutPallas(Cin, Cout, ksize,
                                        stride=stride, padding=padding,
                                        prior_sigma=1.0, key=kp)

    # 1) Stochastic forward through the default (bf16-MXU) Pallas path.
    y = jax.block_until_ready(layer.forward(x, stochastic=True, key=ke))
    assert y.shape == (B, Cout, H, W), y.shape
    assert bool(jnp.all(jnp.isfinite(y)))

    # 2) Deterministic f32 path vs. high-precision lax conv reference.
    y_det = jax.block_until_ready(
        layer.forward(x, stochastic=False, compute_dtype=jnp.float32))
    y_ref = jax.lax.conv_general_dilated(
        x, layer.weights_mean,
        window_strides=(stride, stride),
        padding=[(padding, padding), (padding, padding)],
        dimension_numbers=("NCHW", "OIHW", "NCHW"),
        precision=jax.lax.Precision.HIGHEST,
    ) + layer.bias_mean.reshape(1, Cout, 1, 1)
    assert jnp.allclose(y_det, y_ref, atol=1e-3, rtol=1e-3), \
        float(jnp.max(jnp.abs(y_det - y_ref)))

    # 3) Deterministic bf16 path vs. bf16-input reference (f32 accumulation).
    y_det_bf16 = jax.block_until_ready(layer.forward(x, stochastic=False))
    y_ref_bf16 = jax.lax.conv_general_dilated(
        x.astype(jnp.bfloat16), layer.weights_mean.astype(jnp.bfloat16),
        window_strides=(stride, stride),
        padding=[(padding, padding), (padding, padding)],
        dimension_numbers=("NCHW", "OIHW", "NCHW"),
        preferred_element_type=jnp.float32,
        precision=jax.lax.Precision.HIGHEST,
    ) + layer.bias_mean.reshape(1, Cout, 1, 1)
    assert jnp.allclose(y_det_bf16, y_ref_bf16, atol=5e-3, rtol=5e-3), \
        float(jnp.max(jnp.abs(y_det_bf16 - y_ref_bf16)))

    # KL loss sanity (finite scalar).
    kl_val = jax.block_until_ready(layer.kl_loss())
    assert jnp.isfinite(kl_val)

    print("KERNEL_OK")
</pallas_src>

<mosaic_0001>
module attributes {stable_mosaic.version = 11 : i64} {
  func.func @_bayes_conv_kernel(%arg0: i32, %arg1: i32, %arg2: memref<512x128xbf16, #tpu.memory_space<vmem>>, %arg3: memref<128x128xf32, #tpu.memory_space<vmem>>, %arg4: memref<128x128xf32, #tpu.memory_space<vmem>>, %arg5: memref<128x128xf32, #tpu.memory_space<vmem>>, %arg6: memref<1x128xf32, #tpu.memory_space<vmem>>, %arg7: memref<1x128xf32, #tpu.memory_space<vmem>>, %arg8: memref<1x128xf32, #tpu.memory_space<vmem>>, %arg9: memref<512x128xf32, #tpu.memory_space<vmem>>, %arg10: memref<128x128xbf16, #tpu.memory_space<vmem>>, %arg11: memref<1x128xf32, #tpu.memory_space<vmem>>) attributes {dimension_semantics = [#tpu.dimension_semantics<parallel>, #tpu.dimension_semantics<arbitrary>], iteration_bounds = array<i64: 1, 1>, scalar_prefetch = 0 : i64, scratch_operands = 2 : i64, tpu.core_type = #tpu.core_type<tc>, window_params = [{transform_indices = @transform_0, window_bounds = array<i64: 512, 128>}, {transform_indices = @transform_1, window_bounds = array<i64: 128, 128>}, {transform_indices = @transform_2, window_bounds = array<i64: 128, 128>}, {transform_indices = @transform_3, window_bounds = array<i64: 128, 128>}, {transform_indices = @transform_4, window_bounds = array<i64: 1, 128>}, {transform_indices = @transform_5, window_bounds = array<i64: 1, 128>}, {transform_indices = @transform_6, window_bounds = array<i64: 1, 128>}, {transform_indices = @transform_7, window_bounds = array<i64: 512, 128>}]} {
    %c0_i32 = arith.constant 0 : i32
    %0 = arith.cmpi eq, %arg1, %c0_i32 : i32
    %1 = arith.extui %0 : i1 to i32
    %c0_i32_0 = arith.constant 0 : i32
    %2 = arith.cmpi ne, %1, %c0_i32_0 : i32
    scf.if %2 {
      %c0_8 = arith.constant 0 : index
      %c0_9 = arith.constant 0 : index
      %10 = vector.load %arg3[%c0_8, %c0_9] : memref<128x128xf32, #tpu.memory_space<vmem>>, vector<128x128xf32>
      %c0_10 = arith.constant 0 : index
      %c0_11 = arith.constant 0 : index
      %11 = vector.load %arg4[%c0_10, %c0_11] : memref<128x128xf32, #tpu.memory_space<vmem>>, vector<128x128xf32>
      %12 = math.exp %11 : vector<128x128xf32>
      %c0_12 = arith.constant 0 : index
      %c0_13 = arith.constant 0 : index
      %13 = vector.load %arg5[%c0_12, %c0_13] : memref<128x128xf32, #tpu.memory_space<vmem>>, vector<128x128xf32>
      %14 = arith.mulf %12, %13 : vector<128x128xf32>
      %15 = arith.addf %10, %14 : vector<128x128xf32>
      %16 = arith.truncf %15 : vector<128x128xf32> to vector<128x128xbf16>
      %c0_14 = arith.constant 0 : index
      %c0_15 = arith.constant 0 : index
      %17 = vector.load %arg10[%c0_14, %c0_15] : memref<128x128xbf16, #tpu.memory_space<vmem>>, vector<128x128xbf16>
      tpu.vector_store %arg10[%c0_14, %c0_15], %16 {strides = array<i32>} : memref<128x128xbf16, #tpu.memory_space<vmem>>, vector<128x128xbf16>,
      %c0_16 = arith.constant 0 : index
      %c0_17 = arith.constant 0 : index
      %18 = vector.load %arg6[%c0_16, %c0_17] : memref<1x128xf32, #tpu.memory_space<vmem>>, vector<1x128xf32>
      %c0_18 = arith.constant 0 : index
      %c0_19 = arith.constant 0 : index
      %19 = vector.load %arg7[%c0_18, %c0_19] : memref<1x128xf32, #tpu.memory_space<vmem>>, vector<1x128xf32>
      %20 = math.exp %19 : vector<1x128xf32>
      %c0_20 = arith.constant 0 : index
      %c0_21 = arith.constant 0 : index
      %21 = vector.load %arg8[%c0_20, %c0_21] : memref<1x128xf32, #tpu.memory_space<vmem>>, vector<1x128xf32>
      %22 = arith.mulf %20, %21 : vector<1x128xf32>
      %23 = arith.addf %18, %22 : vector<1x128xf32>
      %c0_22 = arith.constant 0 : index
      %c0_23 = arith.constant 0 : index
      %24 = vector.load %arg11[%c0_22, %c0_23] : memref<1x128xf32, #tpu.memory_space<vmem>>, vector<1x128xf32>
      tpu.vector_store %arg11[%c0_22, %c0_23], %23 {strides = array<i32>} : memref<1x128xf32, #tpu.memory_space<vmem>>, vector<1x128xf32>,
    } else {
    }
    %c0 = arith.constant 0 : index
    %c0_1 = arith.constant 0 : index
    %3 = vector.load %arg2[%c0, %c0_1] : memref<512x128xbf16, #tpu.memory_space<vmem>>, vector<512x128xbf16>
    %c0_2 = arith.constant 0 : index
    %c0_3 = arith.constant 0 : index
    %4 = vector.load %arg10[%c0_2, %c0_3] : memref<128x128xbf16, #tpu.memory_space<vmem>>, vector<128x128xbf16>
    %cst = arith.constant dense<0.000000e+00> : vector<512x128xf32>
    %5 = tpu.matmul %3, %4, %cst {dimension_numbers = #tpu.dot_dimension_numbers<[1], [0], [0], [1], [0, 0, 1, 1], [], []>} : vector<512x128xbf16>, vector<128x128xbf16>, vector<512x128xf32> -> vector<512x128xf32>
    %c0_4 = arith.constant 0 : index
    %c0_5 = arith.constant 0 : index
    %6 = vector.load %arg11[%c0_4, %c0_5] : memref<1x128xf32, #tpu.memory_space<vmem>>, vector<1x128xf32>
    %7 = vector.broadcast %6 : vector<1x128xf32> to vector<512x128xf32>
    %8 = arith.addf %5, %7 : vector<512x128xf32>
    %c0_6 = arith.constant 0 : index
    %c0_7 = arith.constant 0 : index
    %9 = vector.load %arg9[%c0_6, %c0_7] : memref<512x128xf32, #tpu.memory_space<vmem>>, vector<512x128xf32>
    tpu.vector_store %arg9[%c0_6, %c0_7], %8 {strides = array<i32>} : memref<512x128xf32, #tpu.memory_space<vmem>>, vector<512x128xf32>,
    return
  }
  func.func @transform_0(%arg0: i32, %arg1: i32) -> (i32, i32) {
    %c0_i32 = arith.constant 0 : i32
    %c0_i32_0 = arith.constant 0 : i32
    return %arg1, %c0_i32 : i32, i32
  }
  func.func @transform_1(%arg0: i32, %arg1: i32) -> (i32, i32) {
    %c0_i32 = arith.constant 0 : i32
    %c0_i32_0 = arith.constant 0 : i32
    return %c0_i32, %arg0 : i32, i32
  }
  func.func @transform_2(%arg0: i32, %arg1: i32) -> (i32, i32) {
    %c0_i32 = arith.constant 0 : i32
    %c0_i32_0 = arith.constant 0 : i32
    return %c0_i32, %arg0 : i32, i32
  }
  func.func @transform_3(%arg0: i32, %arg1: i32) -> (i32, i32) {
    %c0_i32 = arith.constant 0 : i32
    %c0_i32_0 = arith.constant 0 : i32
    return %c0_i32, %arg0 : i32, i32
  }
  func.func @transform_4(%arg0: i32, %arg1: i32) -> (i32, i32) {
    %c0_i32 = arith.constant 0 : i32
    %c0_i32_0 = arith.constant 0 : i32
    return %c0_i32, %arg0 : i32, i32
  }
  func.func @transform_5(%arg0: i32, %arg1: i32) -> (i32, i32) {
    %c0_i32 = arith.constant 0 : i32
    %c0_i32_0 = arith.constant 0 : i32
    return %c0_i32, %arg0 : i32, i32
  }
  func.func @transform_6(%arg0: i32, %arg1: i32) -> (i32, i32) {
    %c0_i32 = arith.constant 0 : i32
    %c0_i32_0 = arith.constant 0 : i32
    return %c0_i32, %arg0 : i32, i32
  }
  func.func @transform_7(%arg0: i32, %arg1: i32) -> (i32, i32) {
    %c0_i32 = arith.constant 0 : i32
    return %arg1, %arg0 : i32, i32
  }
}

</mosaic_0001>

<llo_original>
// kernel: tpu_custom_call.1
$region0: #{tpu_custom_call.1}
  #allocation0 [shape = 'u32[]', space=smem, size = 0x4, offset = 0x4, fixed_abs, tag = 'smem constant byte address 0x4 - core index']
  #allocation1 [shape = 'u32[144,128]{1,0:T(1,128)}', space=vmem, size = 0x12000, scoped, tag = 'internal scratch']
  #allocation2 [shape = 'bf16[128,128]{1,0:T(16,128)(2,1)}', space=vmem, size = 0x8000, scoped, tag = 'scratch operand']
  #allocation3 [shape = 'f32[1,128]{1,0:T(1,128)}', space=vmem, size = 0x200, scoped, tag = 'scratch operand']
  %s0 = inlined_call_operand.hbm [shape: bf16[512,128], index: 0, kind: input, shape index: {}]
  %s1 = inlined_call_operand.hbm [shape: f32[128,128], index: 1, kind: input, shape index: {}]
  %s2 = inlined_call_operand.hbm [shape: f32[128,128], index: 2, kind: input, shape index: {}]
  %s3 = inlined_call_operand.hbm [shape: f32[128,128], index: 3, kind: input, shape index: {}]
  %s4 = inlined_call_operand.hbm [shape: f32[1,128], index: 4, kind: input, shape index: {}]
  %s5 = inlined_call_operand.hbm [shape: f32[1,128], index: 5, kind: input, shape index: {}]
  %s6 = inlined_call_operand.hbm [shape: f32[1,128], index: 6, kind: input, shape index: {}]
  %s7 = inlined_call_operand.hbm [shape: f32[512,128], index: 7, kind: output, shape index: {}]
  %s8 = sld [smem:[#allocation0]]
  $region70: #{tpu_custom_call.1} parent=0
    _
  %s10 = ssub.s32 1, %s8
  %s11 = scalar_select 0, %s10, %s8
  $region1: #{tpu_custom_call.1} parent=0
    #allocation4 [shape = 'u8[131072]{0}', space=vmem, size = 0x20000, scoped, tag = 'input window, operand 0, single buffered']
    #allocation5 [shape = 's32[1]{0}', space=sflag, size = 0x4, scoped, tag = 'scoped memory for tpu_custom_call.1']
    #allocation6 [shape = 's32[1]{0}', space=sflag, size = 0x4, scoped, tag = 'scoped memory for tpu_custom_call.1']
    #allocation7 [shape = 'u8[65536]{0}', space=vmem, size = 0x10000, scoped, tag = 'input window, operand 1, single buffered']
    #allocation8 [shape = 's32[1]{0}', space=sflag, size = 0x4, scoped, tag = 'scoped memory for tpu_custom_call.1']
    #allocation9 [shape = 'u8[65536]{0}', space=vmem, size = 0x10000, scoped, tag = 'input window, operand 2, single buffered']
    #allocation10 [shape = 'u8[65536]{0}', space=vmem, size = 0x10000, scoped, tag = 'input window, operand 3, single buffered']
    #allocation11 [shape = 's32[1]{0}', space=sflag, size = 0x4, scoped, tag = 'scoped memory for tpu_custom_call.1']
    #allocation12 [shape = 'u8[512]{0}', space=vmem, size = 0x400, scoped, tag = 'input window, operand 4, single buffered']
    #allocation13 [shape = 'u8[512]{0}', space=vmem, size = 0x400, scoped, tag = 'input window, operand 5, single buffered']
    #allocation14 [shape = 's32[1]{0}', space=sflag, size = 0x4, scoped, tag = 'scoped memory for tpu_custom_call.1']
    #allocation15 [shape = 'u8[512]{0}', space=vmem, size = 0x400, scoped, tag = 'input window, operand 6, single buffered']
    #allocation16 [shape = 'u8[262144]{0}', space=vmem, size = 0x40000, scoped, tag = 'output window, operand 0, single buffered']
    %12 = vsyncpa [#allocation5], 0
    %13 = vsyncpa [#allocation8], 0
    %14 = vsyncpa [#allocation11], 0
    %15 = vsyncpa [#allocation14], 0
    %16 = vsyncpa [#allocation6], 0
    // Predicated region
    $region2: #{tpu_custom_call.1} parent=1 // pred_check
      _
    $region3: #{tpu_custom_call.1} parent=1 // pred_check_branch
      %18 = sbr.rel (0) target = $region5
    $region4: #{tpu_custom_call.1} parent=1 // pred_region
      %s20 = ssub.s32 4096, 4096
      %21 = vsyncadd [#allocation5], %s20
      %s22 = sshll.u32 [#allocation4], 4
      %s23 = int_to_ptr.vmem [resolvable:$true] %s22
      %28 = dma.hbm_to_vmem [thread:$0]  %s0, 4096, %s23, [#allocation5], 64, 64, 4
    $region5: #{tpu_custom_call.1} parent=1 // pred_fallthru
      _
    // Predicated region
    $region6: #{tpu_custom_call.1} parent=1 // pred_check
      _
    $region7: #{tpu_custom_call.1} parent=1 // pred_check_branch
      %30 = sbr.rel (0) target = $region9
    $region8: #{tpu_custom_call.1} parent=1 // pred_region
      %s32 = ssub.s32 2048, 2048
      %33 = vsyncadd [#allocation8], %s32
      %s34 = sshll.u32 [#allocation7], 4
      %s35 = int_to_ptr.vmem [resolvable:$true] %s34
      %40 = dma.hbm_to_vmem [thread:$0]  %s1, 2048, %s35, [#allocation8], 128, 128, 8
    $region9: #{tpu_custom_call.1} parent=1 // pred_fallthru
      _
    // Predicated region
    $region10: #{tpu_custom_call.1} parent=1 // pred_check
      _
    $region11: #{tpu_custom_call.1} parent=1 // pred_check_branch
      %42 = sbr.rel (0) target = $region13
    $region12: #{tpu_custom_call.1} parent=1 // pred_region
      %s44 = ssub.s32 2048, 2048
      %45 = vsyncadd [#allocation8], %s44
      %s46 = sshll.u32 [#allocation9], 4
      %s47 = int_to_ptr.vmem [resolvable:$true] %s46
      %52 = dma.hbm_to_vmem [thread:$0]  %s2, 2048, %s47, [#allocation8], 128, 128, 8
    $region13: #{tpu_custom_call.1} parent=1 // pred_fallthru
      _
    // Predicated region
    $region14: #{tpu_custom_call.1} parent=1 // pred_check
      _
    $region15: #{tpu_custom_call.1} parent=1 // pred_check_branch
      %54 = sbr.rel (0) target = $region17
    $region16: #{tpu_custom_call.1} parent=1 // pred_region
      %s56 = ssub.s32 2048, 2048
      %57 = vsyncadd [#allocation11], %s56
      %s58 = sshll.u32 [#allocation10], 4
      %s59 = int_to_ptr.vmem [resolvable:$true] %s58
      %64 = dma.hbm_to_vmem [thread:$0]  %s3, 2048, %s59, [#allocation11], 128, 128, 8
    $region17: #{tpu_custom_call.1} parent=1 // pred_fallthru
      _
    // Predicated region
    $region18: #{tpu_custom_call.1} parent=1 // pred_check
      _
    $region19: #{tpu_custom_call.1} parent=1 // pred_check_branch
      %66 = sbr.rel (0) target = $region21
    $region20: #{tpu_custom_call.1} parent=1 // pred_region
      %s68 = ssub.s32 16, 16
      %69 = vsyncadd [#allocation11], %s68
      %s71 = sshll.u32 [#allocation12], 4
      %s72 = int_to_ptr.vmem [resolvable:$true] %s71
      %74 = dma.hbm_to_vmem [thread:$0]  %s4, 16, %s72, [#allocation11]
    $region21: #{tpu_custom_call.1} parent=1 // pred_fallthru
      _
    // Predicated region
    $region22: #{tpu_custom_call.1} parent=1 // pred_check
      _
    $region23: #{tpu_custom_call.1} parent=1 // pred_check_branch
      %76 = sbr.rel (0) target = $region25
    $region24: #{tpu_custom_call.1} parent=1 // pred_region
      %s78 = ssub.s32 16, 16
      %79 = vsyncadd [#allocation14], %s78
      %s81 = sshll.u32 [#allocation13], 4
      %s82 = int_to_ptr.vmem [resolvable:$true] %s81
      %84 = dma.hbm_to_vmem [thread:$0]  %s5, 16, %s82, [#allocation14]
    $region25: #{tpu_custom_call.1} parent=1 // pred_fallthru
      _
    // Predicated region
    $region26: #{tpu_custom_call.1} parent=1 // pred_check
      _
    $region27: #{tpu_custom_call.1} parent=1 // pred_check_branch
      %86 = sbr.rel (0) target = $region29
    $region28: #{tpu_custom_call.1} parent=1 // pred_region
      %s88 = ssub.s32 16, 16
      %89 = vsyncadd [#allocation14], %s88
      %s91 = sshll.u32 [#allocation15], 4
      %s92 = int_to_ptr.vmem [resolvable:$true] %s91
      %94 = dma.hbm_to_vmem [thread:$0]  %s6, 16, %s92, [#allocation14]
    $region29: #{tpu_custom_call.1} parent=1 // pred_fallthru
      _
    // Predicated region
    $region30: #{tpu_custom_call.1} parent=1 // pred_check
      _
    $region31: #{tpu_custom_call.1} parent=1 // pred_check_branch
      %96 = sbr.rel (0) target = $region33
    $region32: #{tpu_custom_call.1} parent=1 // pred_region
      %97 = dma.done [#allocation5], 4096
    $region33: #{tpu_custom_call.1} parent=1 // pred_fallthru
      _
    // Predicated region
    $region34: #{tpu_custom_call.1} parent=1 // pred_check
      _
    $region35: #{tpu_custom_call.1} parent=1 // pred_check_branch
      %99 = sbr.rel (0) target = $region37
    $region36: #{tpu_custom_call.1} parent=1 // pred_region
      %100 = dma.done [#allocation8], 2048
    $region37: #{tpu_custom_call.1} parent=1 // pred_fallthru
      _
    // Predicated region
    $region38: #{tpu_custom_call.1} parent=1 // pred_check
      _
    $region39: #{tpu_custom_call.1} parent=1 // pred_check_branch
      %102 = sbr.rel (0) target = $region41
    $region40: #{tpu_custom_call.1} parent=1 // pred_region
      %103 = dma.done [#allocation8], 2048
    $region41: #{tpu_custom_call.1} parent=1 // pred_fallthru
      _
    // Predicated region
    $region42: #{tpu_custom_call.1} parent=1 // pred_check
      _
    $region43: #{tpu_custom_call.1} parent=1 // pred_check_branch
      %105 = sbr.rel (0) target = $region45
    $region44: #{tpu_custom_call.1} parent=1 // pred_region
      %106 = dma.done [#allocation11], 2048
    $region45: #{tpu_custom_call.1} parent=1 // pred_fallthru
      _
    // Predicated region
    $region46: #{tpu_custom_call.1} parent=1 // pred_check
      _
    $region47: #{tpu_custom_call.1} parent=1 // pred_check_branch
      %108 = sbr.rel (0) target = $region49
    $region48: #{tpu_custom_call.1} parent=1 // pred_region
      %109 = dma.done [#allocation11], 16
    $region49: #{tpu_custom_call.1} parent=1 // pred_fallthru
      _
    // Predicated region
    $region50: #{tpu_custom_call.1} parent=1 // pred_check
      _
    $region51: #{tpu_custom_call.1} parent=1 // pred_check_branch
      %111 = sbr.rel (0) target = $region53
    $region52: #{tpu_custom_call.1} parent=1 // pred_region
      %112 = dma.done [#allocation14], 16
    $region53: #{tpu_custom_call.1} parent=1 // pred_fallthru
      _
    // Predicated region
    $region54: #{tpu_custom_call.1} parent=1 // pred_check
      _
    $region55: #{tpu_custom_call.1} parent=1 // pred_check_branch
      %114 = sbr.rel (0) target = $region57
    $region56: #{tpu_custom_call.1} parent=1 // pred_region
      %115 = dma.done [#allocation14], 16
    $region57: #{tpu_custom_call.1} parent=1 // pred_fallthru
      _
    %p117 = scmp.eq.s32.totalorder 0, 0
    // Predicated region
    $region58: #{tpu_custom_call.1} parent=1 // pred_check
      %p118 = pneg %p117
    $region59: #{tpu_custom_call.1} parent=1 // pred_check_branch
      %120 = sbr.rel (%p118) target = $region61
    $region60: #{tpu_custom_call.1} parent=1 // pred_region
      %v121 = vld [vmem:[#allocation7] sm:$0xff]
      %v122 = vld [vmem:[#allocation7 + $0x8] sm:$0xff]
      %v123 = vld [vmem:[#allocation7 + $0x10] sm:$0xff]
      %v124 = vld [vmem:[#allocation7 + $0x18] sm:$0xff]
      %v125 = vld [vmem:[#allocation7 + $0x20] sm:$0xff]
      %v126 = vld [vmem:[#allocation7 + $0x28] sm:$0xff]
      %v127 = vld [vmem:[#allocation7 + $0x30] sm:$0xff]
      %v128 = vld [vmem:[#allocation7 + $0x38] sm:$0xff]
      %v129 = vld [vmem:[#allocation7 + $0x40] sm:$0xff]
      %v130 = vld [vmem:[#allocation7 + $0x48] sm:$0xff]
      %v131 = vld [vmem:[#allocation7 + $0x50] sm:$0xff]
      %v132 = vld [vmem:[#allocation7 + $0x58] sm:$0xff]
      %v133 = vld [vmem:[#allocation7 + $0x60] sm:$0xff]
      %v134 = vld [vmem:[#allocation7 + $0x68] sm:$0xff]
      %v135 = vld [vmem:[#allocation7 + $0x70] sm:$0xff]
      %v136 = vld [vmem:[#allocation7 + $0x78] sm:$0xff]
      %v137 = vld [vmem:[#allocation9] sm:$0xff]
      %v138 = vld [vmem:[#allocation9 + $0x8] sm:$0xff]
      %v139 = vld [vmem:[#allocation9 + $0x10] sm:$0xff]
      %v140 = vld [vmem:[#allocation9 + $0x18] sm:$0xff]
      %v141 = vld [vmem:[#allocation9 + $0x20] sm:$0xff]
      %v142 = vld [vmem:[#allocation9 + $0x28] sm:$0xff]
      %v143 = vld [vmem:[#allocation9 + $0x30] sm:$0xff]
      %v144 = vld [vmem:[#allocation9 + $0x38] sm:$0xff]
      %v145 = vld [vmem:[#allocation9 + $0x40] sm:$0xff]
      %v146 = vld [vmem:[#allocation9 + $0x48] sm:$0xff]
      %v147 = vld [vmem:[#allocation9 + $0x50] sm:$0xff]
      %v148 = vld [vmem:[#allocation9 + $0x58] sm:$0xff]
      %v149 = vld [vmem:[#allocation9 + $0x60] sm:$0xff]
      %v150 = vld [vmem:[#allocation9 + $0x68] sm:$0xff]
      %v151 = vld [vmem:[#allocation9 + $0x70] sm:$0xff]
      %v152 = vld [vmem:[#allocation9 + $0x78] sm:$0xff]
      %v153 = vmul.f32 %v137, 1.442695
      %v154 = vpow.pop %v153
      %v155 = vmul.f32 %v138, 1.442695
      %v156 = vpow.pop %v155
      %v157 = vmul.f32 %v139, 1.442695
      %v158 = vpow.pop %v157
      %v159 = vmul.f32 %v140, 1.442695
      %v160 = vpow.pop %v159
      %v161 = vmul.f32 %v141, 1.442695
      %v162 = vpow.pop %v161
      %v163 = vmul.f32 %v142, 1.442695
      %v164 = vpow.pop %v163
      %v165 = vmul.f32 %v143, 1.442695
      %v166 = vpow.pop %v165
      %v167 = vmul.f32 %v144, 1.442695
      %v168 = vpow.pop %v167
      %v169 = vmul.f32 %v145, 1.442695
      %v170 = vpow.pop %v169
      %v171 = vmul.f32 %v146, 1.442695
      %v172 = vpow.pop %v171
      %v173 = vmul.f32 %v147, 1.442695
      %v174 = vpow.pop %v173
      %v175 = vmul.f32 %v148, 1.442695
      %v176 = vpow.pop %v175
      %v177 = vmul.f32 %v149, 1.442695
      %v178 = vpow.pop %v177
      %v179 = vmul.f32 %v150, 1.442695
      %v180 = vpow.pop %v179
      %v181 = vmul.f32 %v151, 1.442695
      %v182 = vpow.pop %v181
      %v183 = vmul.f32 %v152, 1.442695
      %v184 = vpow.pop %v183
      %v185 = vld [vmem:[#allocation10] sm:$0xff]
      %v186 = vld [vmem:[#allocation10 + $0x8] sm:$0xff]
      %v187 = vld [vmem:[#allocation10 + $0x10] sm:$0xff]
      %v188 = vld [vmem:[#allocation10 + $0x18] sm:$0xff]
      %v189 = vld [vmem:[#allocation10 + $0x20] sm:$0xff]
      %v190 = vld [vmem:[#allocation10 + $0x28] sm:$0xff]
      %v191 = vld [vmem:[#allocation10 + $0x30] sm:$0xff]
      %v192 = vld [vmem:[#allocation10 + $0x38] sm:$0xff]
      %v193 = vld [vmem:[#allocation10 + $0x40] sm:$0xff]
      %v194 = vld [vmem:[#allocation10 + $0x48] sm:$0xff]
      %v195 = vld [vmem:[#allocation10 + $0x50] sm:$0xff]
      %v196 = vld [vmem:[#allocation10 + $0x58] sm:$0xff]
      %v197 = vld [vmem:[#allocation10 + $0x60] sm:$0xff]
      %v198 = vld [vmem:[#allocation10 + $0x68] sm:$0xff]
      %v199 = vld [vmem:[#allocation10 + $0x70] sm:$0xff]
      %v200 = vld [vmem:[#allocation10 + $0x78] sm:$0xff]
      %v201 = vmul.f32 %v154, %v185
      %v202 = vmul.f32 %v156, %v186
      %v203 = vmul.f32 %v158, %v187
      %v204 = vmul.f32 %v160, %v188
      %v205 = vmul.f32 %v162, %v189
      %v206 = vmul.f32 %v164, %v190
      %v207 = vmul.f32 %v166, %v191
      %v208 = vmul.f32 %v168, %v192
      %v209 = vmul.f32 %v170, %v193
      %v210 = vmul.f32 %v172, %v194
      %v211 = vmul.f32 %v174, %v195
      %v212 = vmul.f32 %v176, %v196
      %v213 = vmul.f32 %v178, %v197
      %v214 = vmul.f32 %v180, %v198
      %v215 = vmul.f32 %v182, %v199
      %v216 = vmul.f32 %v184, %v200
      %v217 = vadd.f32 %v121, %v201
      %v218 = vadd.f32 %v122, %v202
      %v219 = vadd.f32 %v123, %v203
      %v220 = vadd.f32 %v124, %v204
      %v221 = vadd.f32 %v125, %v205
      %v222 = vadd.f32 %v126, %v206
      %v223 = vadd.f32 %v127, %v207
      %v224 = vadd.f32 %v128, %v208
      %v225 = vadd.f32 %v129, %v209
      %v226 = vadd.f32 %v130, %v210
      %v227 = vadd.f32 %v131, %v211
      %v228 = vadd.f32 %v132, %v212
      %v229 = vadd.f32 %v133, %v213
      %v230 = vadd.f32 %v134, %v214
      %v231 = vadd.f32 %v135, %v215
      %v232 = vadd.f32 %v136, %v216
      %v233 = vpack.c.bf16 %v218, %v217
      %v234 = vpack.c.bf16 %v220, %v219
      %v235 = vpack.c.bf16 %v222, %v221
      %v236 = vpack.c.bf16 %v224, %v223
      %v237 = vpack.c.bf16 %v226, %v225
      %v238 = vpack.c.bf16 %v228, %v227
      %v239 = vpack.c.bf16 %v230, %v229
      %v240 = vpack.c.bf16 %v232, %v231
      %241 = vst [vmem:[#allocation2] sm:$0xff] %v233
      %242 = vst [vmem:[#allocation2 + $0x8] sm:$0xff] %v234
      %243 = vst [vmem:[#allocation2 + $0x10] sm:$0xff] %v235
      %244 = vst [vmem:[#allocation2 + $0x18] sm:$0xff] %v236
      %245 = vst [vmem:[#allocation2 + $0x20] sm:$0xff] %v237
      %246 = vst [vmem:[#allocation2 + $0x28] sm:$0xff] %v238
      %247 = vst [vmem:[#allocation2 + $0x30] sm:$0xff] %v239
      %248 = vst [vmem:[#allocation2 + $0x38] sm:$0xff] %v240
      %v249 = vld [vmem:[#allocation12] sm:$0x1]
      %v250 = vld [vmem:[#allocation13] sm:$0x1]
      %v251 = vmul.f32 %v250, 1.442695
      %v252 = vpow.pop %v251
      %v253 = vld [vmem:[#allocation15] sm:$0x1]
      %v254 = vmul.f32 %v252, %v253
      %v255 = vadd.f32 %v249, %v254
      %256 = vst [vmem:[#allocation3] sm:$0x1] %v255
    $region61: #{tpu_custom_call.1} parent=1 // pred_fallthru
      _
    %v257 = vld [vmem:[#allocation4] sm:$0xf]
    %v258 = vld [vmem:[#allocation4 + $0x4] sm:$0xf]
    %v259 = vld [vmem:[#allocation4 + $0x8] sm:$0xf]
    %v260 = vld [vmem:[#allocation4 + $0xc] sm:$0xf]
    %v261 = vld [vmem:[#allocation4 + $0x10] sm:$0xf]
    %v262 = vld [vmem:[#allocation4 + $0x14] sm:$0xf]
    %v263 = vld [vmem:[#allocation4 + $0x18] sm:$0xf]
    %v264 = vld [vmem:[#allocation4 + $0x1c] sm:$0xf]
    %v265 = vld [vmem:[#allocation4 + $0x20] sm:$0xf]
    %v266 = vld [vmem:[#allocation4 + $0x24] sm:$0xf]
    %v267 = vld [vmem:[#allocation4 + $0x28] sm:$0xf]
    %v268 = vld [vmem:[#allocation4 + $0x2c] sm:$0xf]
    %v269 = vld [vmem:[#allocation4 + $0x30] sm:$0xf]
    %v270 = vld [vmem:[#allocation4 + $0x34] sm:$0xf]
    %v271 = vld [vmem:[#allocation4 + $0x38] sm:$0xf]
    %v272 = vld [vmem:[#allocation4 + $0x3c] sm:$0xf]
    %v273 = vld [vmem:[#allocation4 + $0x40] sm:$0xf]
    %v274 = vld [vmem:[#allocation4 + $0x44] sm:$0xf]
    %v275 = vld [vmem:[#allocation4 + $0x48] sm:$0xf]
    %v276 = vld [vmem:[#allocation4 + $0x4c] sm:$0xf]
    %v277 = vld [vmem:[#allocation4 + $0x50] sm:$0xf]
    %v278 = vld [vmem:[#allocation4 + $0x54] sm:$0xf]
    %v279 = vld [vmem:[#allocation4 + $0x58] sm:$0xf]
    %v280 = vld [vmem:[#allocation4 + $0x5c] sm:$0xf]
    %v281 = vld [vmem:[#allocation4 + $0x60] sm:$0xf]
    %v282 = vld [vmem:[#allocation4 + $0x64] sm:$0xf]
    %v283 = vld [vmem:[#allocation4 + $0x68] sm:$0xf]
    %v284 = vld [vmem:[#allocation4 + $0x6c] sm:$0xf]
    %v285 = vld [vmem:[#allocation4 + $0x70] sm:$0xf]
    %v286 = vld [vmem:[#allocation4 + $0x74] sm:$0xf]
    %v287 = vld [vmem:[#allocation4 + $0x78] sm:$0xf]
    %v288 = vld [vmem:[#allocation4 + $0x7c] sm:$0xf]
    %v289 = vld [vmem:[#allocation4 + $0x80] sm:$0xf]
    %v290 = vld [vmem:[#allocation4 + $0x84] sm:$0xf]
    %v291 = vld [vmem:[#allocation4 + $0x88] sm:$0xf]
    %v292 = vld [vmem:[#allocation4 + $0x8c] sm:$0xf]
    %v293 = vld [vmem:[#allocation4 + $0x90] sm:$0xf]
    %v294 = vld [vmem:[#allocation4 + $0x94] sm:$0xf]
    %v295 = vld [vmem:[#allocation4 + $0x98] sm:$0xf]
    %v296 = vld [vmem:[#allocation4 + $0x9c] sm:$0xf]
    %v297 = vld [vmem:[#allocation4 + $0xa0] sm:$0xf]
    %v298 = vld [vmem:[#allocation4 + $0xa4] sm:$0xf]
    %v299 = vld [vmem:[#allocation4 + $0xa8] sm:$0xf]
    %v300 = vld [vmem:[#allocation4 + $0xac] sm:$0xf]
    %v301 = vld [vmem:[#allocation4 + $0xb0] sm:$0xf]
    %v302 = vld [vmem:[#allocation4 + $0xb4] sm:$0xf]
    %v303 = vld [vmem:[#allocation4 + $0xb8] sm:$0xf]
    %v304 = vld [vmem:[#allocation4 + $0xbc] sm:$0xf]
    %v305 = vld [vmem:[#allocation4 + $0xc0] sm:$0xf]
    %v306 = vld [vmem:[#allocation4 + $0xc4] sm:$0xf]
    %v307 = vld [vmem:[#allocation4 + $0xc8] sm:$0xf]
    %v308 = vld [vmem:[#allocation4 + $0xcc] sm:$0xf]
    %v309 = vld [vmem:[#allocation4 + $0xd0] sm:$0xf]
    %v310 = vld [vmem:[#allocation4 + $0xd4] sm:$0xf]
    %v311 = vld [vmem:[#allocation4 + $0xd8] sm:$0xf]
    %v312 = vld [vmem:[#allocation4 + $0xdc] sm:$0xf]
    %v313 = vld [vmem:[#allocation4 + $0xe0] sm:$0xf]
    %v314 = vld [vmem:[#allocation4 + $0xe4] sm:$0xf]
    %v315 = vld [vmem:[#allocation4 + $0xe8] sm:$0xf]
    %v316 = vld [vmem:[#allocation4 + $0xec] sm:$0xf]
    %v317 = vld [vmem:[#allocation4 + $0xf0] sm:$0xf]
    %v318 = vld [vmem:[#allocation4 + $0xf4] sm:$0xf]
    %v319 = vld [vmem:[#allocation4 + $0xf8] sm:$0xf]
    %v320 = vld [vmem:[#allocation4 + $0xfc] sm:$0xf]
    %v321 = vld [vmem:[#allocation2] sm:$0xff]
    %v322 = vld [vmem:[#allocation2 + $0x8] sm:$0xff]
    %v323 = vld [vmem:[#allocation2 + $0x10] sm:$0xff]
    %v324 = vld [vmem:[#allocation2 + $0x18] sm:$0xff]
    %v325 = vld [vmem:[#allocation2 + $0x20] sm:$0xff]
    %v326 = vld [vmem:[#allocation2 + $0x28] sm:$0xff]
    %v327 = vld [vmem:[#allocation2 + $0x30] sm:$0xff]
    %v328 = vld [vmem:[#allocation2 + $0x38] sm:$0xff]
    %v329 = vld [vmem:[#allocation3] sm:$0x1]
    %v331 = vlaneseq
    %v332 = vshrl.u32 %v331, 7
    %v333 = vsub.s32 0, %v332
    %v334 = vrot.slane %v329, %v333
    %v400 = vunpack.c.l.b16 %v257
    %v401 = vunpack.c.l.b16 %v258
    %v402 = vunpack.c.l.b16 %v259
    %v403 = vunpack.c.l.b16 %v260
    %v404 = vunpack.c.l.b16 %v261
    %v405 = vunpack.c.l.b16 %v262
    %v406 = vunpack.c.l.b16 %v263
    %v407 = vunpack.c.l.b16 %v264
    %v408 = vunpack.c.l.b16 %v265
    %v409 = vunpack.c.l.b16 %v266
    %v410 = vunpack.c.l.b16 %v267
    %v411 = vunpack.c.l.b16 %v268
    %v412 = vunpack.c.l.b16 %v269
    %v413 = vunpack.c.l.b16 %v270
    %v414 = vunpack.c.l.b16 %v271
    %v415 = vunpack.c.l.b16 %v272
    %v416 = vunpack.c.l.b16 %v273
    %v417 = vunpack.c.l.b16 %v274
    %v418 = vunpack.c.l.b16 %v275
    %v419 = vunpack.c.l.b16 %v276
    %v420 = vunpack.c.l.b16 %v277
    %v421 = vunpack.c.l.b16 %v278
    %v422 = vunpack.c.l.b16 %v279
    %v423 = vunpack.c.l.b16 %v280
    %v424 = vunpack.c.l.b16 %v281
    %v425 = vunpack.c.l.b16 %v282
    %v426 = vunpack.c.l.b16 %v283
    %v427 = vunpack.c.l.b16 %v284
    %v428 = vunpack.c.l.b16 %v285
    %v429 = vunpack.c.l.b16 %v286
    %v430 = vunpack.c.l.b16 %v287
    %v431 = vunpack.c.l.b16 %v288
    %v432 = vunpack.c.l.b16 %v289
    %v433 = vunpack.c.l.b16 %v290
    %v434 = vunpack.c.l.b16 %v291
    %v435 = vunpack.c.l.b16 %v292
    %v436 = vunpack.c.l.b16 %v293
    %v437 = vunpack.c.l.b16 %v294
    %v438 = vunpack.c.l.b16 %v295
    %v439 = vunpack.c.l.b16 %v296
    %v440 = vunpack.c.l.b16 %v297
    %v441 = vunpack.c.l.b16 %v298
    %v442 = vunpack.c.l.b16 %v299
    %v443 = vunpack.c.l.b16 %v300
    %v444 = vunpack.c.l.b16 %v301
    %v445 = vunpack.c.l.b16 %v302
    %v446 = vunpack.c.l.b16 %v303
    %v447 = vunpack.c.l.b16 %v304
    %v448 = vunpack.c.l.b16 %v305
    %v449 = vunpack.c.l.b16 %v306
    %v450 = vunpack.c.l.b16 %v307
    %v451 = vunpack.c.l.b16 %v308
    %v452 = vunpack.c.l.b16 %v309
    %v453 = vunpack.c.l.b16 %v310
    %v454 = vunpack.c.l.b16 %v311
    %v455 = vunpack.c.l.b16 %v312
    %v456 = vunpack.c.l.b16 %v313
    %v457 = vunpack.c.l.b16 %v314
    %v458 = vunpack.c.l.b16 %v315
    %v459 = vunpack.c.l.b16 %v316
    %v460 = vunpack.c.l.b16 %v317
    %v461 = vunpack.c.l.b16 %v318
    %v462 = vunpack.c.l.b16 %v319
    %v463 = vunpack.c.l.b16 %v320
    %v464 = vpack.c.b16 %v401, %v400
    %v465 = vpack.c.b16 %v403, %v402
    %v466 = vpack.c.b16 %v405, %v404
    %v467 = vpack.c.b16 %v407, %v406
    %v468 = vpack.c.b16 %v409, %v408
    %v469 = vpack.c.b16 %v411, %v410
    %v470 = vpack.c.b16 %v413, %v412
    %v471 = vpack.c.b16 %v415, %v414
    %v472 = vpack.c.b16 %v417, %v416
    %v473 = vpack.c.b16 %v419, %v418
    %v474 = vpack.c.b16 %v421, %v420
    %v475 = vpack.c.b16 %v423, %v422
    %v476 = vpack.c.b16 %v425, %v424
    %v477 = vpack.c.b16 %v427, %v426
    %v478 = vpack.c.b16 %v429, %v428
    %v479 = vpack.c.b16 %v431, %v430
    %v480 = vpack.c.b16 %v433, %v432
    %v481 = vpack.c.b16 %v435, %v434
    %v482 = vpack.c.b16 %v437, %v436
    %v483 = vpack.c.b16 %v439, %v438
    %v484 = vpack.c.b16 %v441, %v440
    %v485 = vpack.c.b16 %v443, %v442
    %v486 = vpack.c.b16 %v445, %v444
    %v487 = vpack.c.b16 %v447, %v446
    %v488 = vpack.c.b16 %v449, %v448
    %v489 = vpack.c.b16 %v451, %v450
    %v490 = vpack.c.b16 %v453, %v452
    %v491 = vpack.c.b16 %v455, %v454
    %v492 = vpack.c.b16 %v457, %v456
    %v493 = vpack.c.b16 %v459, %v458
    %v494 = vpack.c.b16 %v461, %v460
    %v495 = vpack.c.b16 %v463, %v462
    %528 = vmatprep.subr.bf16.mxu0 0
    %529 = vmatpush1.bf16.msra.mxu0 %v321
    %530 = vmatprep.subr.bf16.mxu0 0
    %531 = vmatpush1.bf16.msra.mxu0 %v322
    %532 = vmatprep.subr.bf16.mxu0 0
    %533 = vmatpush1.bf16.msra.mxu0 %v323
    %534 = vmatprep.subr.bf16.mxu0 0
    %535 = vmatpush1.bf16.msra.mxu0 %v324
    %536 = vmatprep.subr.bf16.mxu0 0
    %537 = vmatpush1.bf16.msra.mxu0 %v325
    %538 = vmatprep.subr.bf16.mxu0 0
    %539 = vmatpush1.bf16.msra.mxu0 %v326
    %540 = vmatprep.subr.bf16.mxu0 0
    %541 = vmatpush1.bf16.msra.mxu0 %v327
    %542 = vmatprep.subr.bf16.mxu0 0
    %543 = vmatpush1.bf16.msra.mxu0 %v328
    %544 = vmatprep.subr.bf16.mxu0 0
    %545 = vmatpush1.bf16.msra.mxu0 0
    %546 = vmatprep.subr.bf16.mxu0 0
    %547 = vmatpush1.bf16.msra.mxu0 0
    %548 = vmatprep.subr.bf16.mxu0 0
    %549 = vmatpush1.bf16.msra.mxu0 0
    %550 = vmatprep.subr.bf16.mxu0 0
    %551 = vmatpush1.bf16.msra.mxu0 0
    %552 = vmatprep.subr.bf16.mxu0 0
    %553 = vmatpush1.bf16.msra.mxu0 0
    %554 = vmatprep.subr.bf16.mxu0 0
    %555 = vmatpush1.bf16.msra.mxu0 0
    %556 = vmatprep.subr.bf16.mxu0 0
    %557 = vmatpush1.bf16.msra.mxu0 0
    %558 = vmatprep.subr.bf16.mxu0 0
    %559 = vmatpush1.bf16.msra.mxu0 0
    %560 = vmatprep.mubr.bf16.mxu0 0
    %561 = vmatmul.mubr.bf16.gmra.mrb[0].mxu0 %v464
    %v562 = vpop.f32.mrb[0].mxu0
    %v563 = vadd.f32 %v334, %v562
    %v564 = vpop.f32.mrb[0].mxu0
    %v565 = vpop.f32.mrb[0].mxu0
    %v566 = vadd.f32 %v334, %v565
    %v567 = vpop.f32.mrb[0].mxu0
    %568 = vmatprep.mubr.bf16.mxu0 0
    %569 = vmatmul.mubr.bf16.gmra.mrb[0].mxu0 %v465
    %v570 = vpop.f32.mrb[0].mxu0
    %v571 = vadd.f32 %v334, %v570
    %v572 = vpop.f32.mrb[0].mxu0
    %v573 = vpop.f32.mrb[0].mxu0
    %v574 = vadd.f32 %v334, %v573
    %v575 = vpop.f32.mrb[0].mxu0
    %576 = vmatprep.mubr.bf16.mxu0 0
    %577 = vmatmul.mubr.bf16.gmra.mrb[0].mxu0 %v466
    %v578 = vpop.f32.mrb[0].mxu0
    %v579 = vadd.f32 %v334, %v578
    %v580 = vpop.f32.mrb[0].mxu0
    %v581 = vpop.f32.mrb[0].mxu0
    %v582 = vadd.f32 %v334, %v581
    %v583 = vpop.f32.mrb[0].mxu0
    %584 = vmatprep.mubr.bf16.mxu0 0
    %585 = vmatmul.mubr.bf16.gmra.mrb[0].mxu0 %v467
    %v586 = vpop.f32.mrb[0].mxu0
    %v587 = vadd.f32 %v334, %v586
    %v588 = vpop.f32.mrb[0].mxu0
    %v589 = vpop.f32.mrb[0].mxu0
    %v590 = vadd.f32 %v334, %v589
    %v591 = vpop.f32.mrb[0].mxu0
    %592 = vmatprep.mubr.bf16.mxu0 0
    %593 = vmatmul.mubr.bf16.gmra.mrb[0].mxu0 %v468
    %v594 = vpop.f32.mrb[0].mxu0
    %v595 = vadd.f32 %v334, %v594
    %v596 = vpop.f32.mrb[0].mxu0
    %v597 = vpop.f32.mrb[0].mxu0
    %v598 = vadd.f32 %v334, %v597
    %v599 = vpop.f32.mrb[0].mxu0
    %600 = vmatprep.mubr.bf16.mxu0 0
    %601 = vmatmul.mubr.bf16.gmra.mrb[0].mxu0 %v469
    %v602 = vpop.f32.mrb[0].mxu0
    %v603 = vadd.f32 %v334, %v602
    %v604 = vpop.f32.mrb[0].mxu0
    %v605 = vpop.f32.mrb[0].mxu0
    %v606 = vadd.f32 %v334, %v605
    %v607 = vpop.f32.mrb[0].mxu0
    %608 = vmatprep.mubr.bf16.mxu0 0
    %609 = vmatmul.mubr.bf16.gmra.mrb[0].mxu0 %v470
    %v610 = vpop.f32.mrb[0].mxu0
    %v611 = vadd.f32 %v334, %v610
    %v612 = vpop.f32.mrb[0].mxu0
    %v613 = vpop.f32.mrb[0].mxu0
    %v614 = vadd.f32 %v334, %v613
    %v615 = vpop.f32.mrb[0].mxu0
    %616 = vmatprep.mubr.bf16.mxu0 0
    %617 = vmatmul.mubr.bf16.gmra.mrb[0].mxu0 %v471
    %v618 = vpop.f32.mrb[0].mxu0
    %v619 = vadd.f32 %v334, %v618
    %v620 = vpop.f32.mrb[0].mxu0
    %v621 = vpop.f32.mrb[0].mxu0
    %v622 = vadd.f32 %v334, %v621
    %v623 = vpop.f32.mrb[0].mxu0
    %624 = vmatprep.mubr.bf16.mxu0 0
    %625 = vmatmul.mubr.bf16.gmra.mrb[0].mxu0 %v472
    %v626 = vpop.f32.mrb[0].mxu0
    %v627 = vadd.f32 %v334, %v626
    %v628 = vpop.f32.mrb[0].mxu0
    %v629 = vpop.f32.mrb[0].mxu0
    %v630 = vadd.f32 %v334, %v629
    %v631 = vpop.f32.mrb[0].mxu0
    %632 = vmatprep.mubr.bf16.mxu0 0
    %633 = vmatmul.mubr.bf16.gmra.mrb[0].mxu0 %v473
    %v634 = vpop.f32.mrb[0].mxu0
    %v635 = vadd.f32 %v334, %v634
    %v636 = vpop.f32.mrb[0].mxu0
    %v637 = vpop.f32.mrb[0].mxu0
    %v638 = vadd.f32 %v334, %v637
    %v639 = vpop.f32.mrb[0].mxu0
    %640 = vmatprep.mubr.bf16.mxu0 0
    %641 = vmatmul.mubr.bf16.gmra.mrb[0].mxu0 %v474
    %v642 = vpop.f32.mrb[0].mxu0
    %v643 = vadd.f32 %v334, %v642
    %v644 = vpop.f32.mrb[0].mxu0
    %v645 = vpop.f32.mrb[0].mxu0
    %v646 = vadd.f32 %v334, %v645
    %v647 = vpop.f32.mrb[0].mxu0
    %648 = vmatprep.mubr.bf16.mxu0 0
    %649 = vmatmul.mubr.bf16.gmra.mrb[0].mxu0 %v475
    %v650 = vpop.f32.mrb[0].mxu0
    %v651 = vadd.f32 %v334, %v650
    %v652 = vpop.f32.mrb[0].mxu0
    %v653 = vpop.f32.mrb[0].mxu0
    %v654 = vadd.f32 %v334, %v653
    %v655 = vpop.f32.mrb[0].mxu0
    %656 = vmatprep.mubr.bf16.mxu0 0
    %657 = vmatmul.mubr.bf16.gmra.mrb[0].mxu0 %v476
    %v658 = vpop.f32.mrb[0].mxu0
    %v659 = vadd.f32 %v334, %v658
    %v660 = vpop.f32.mrb[0].mxu0
    %v661 = vpop.f32.mrb[0].mxu0
    %v662 = vadd.f32 %v334, %v661
    %v663 = vpop.f32.mrb[0].mxu0
    %664 = vmatprep.mubr.bf16.mxu0 0
    %665 = vmatmul.mubr.bf16.gmra.mrb[0].mxu0 %v477
    %v666 = vpop.f32.mrb[0].mxu0
    %v667 = vadd.f32 %v334, %v666
    %v668 = vpop.f32.mrb[0].mxu0
    %v669 = vpop.f32.mrb[0].mxu0
    %v670 = vadd.f32 %v334, %v669
    %v671 = vpop.f32.mrb[0].mxu0
    %672 = vmatprep.mubr.bf16.mxu0 0
    %673 = vmatmul.mubr.bf16.gmra.mrb[0].mxu0 %v478
    %v674 = vpop.f32.mrb[0].mxu0
    %v675 = vadd.f32 %v334, %v674
    %v676 = vpop.f32.mrb[0].mxu0
    %v677 = vpop.f32.mrb[0].mxu0
    %v678 = vadd.f32 %v334, %v677
    %v679 = vpop.f32.mrb[0].mxu0
    %680 = vmatprep.mubr.bf16.mxu0 0
    %681 = vmatmul.mubr.bf16.gmra.mrb[0].mxu0 %v479
    %v682 = vpop.f32.mrb[0].mxu0
    %v683 = vadd.f32 %v334, %v682
    %v684 = vpop.f32.mrb[0].mxu0
    %v685 = vpop.f32.mrb[0].mxu0
    %v686 = vadd.f32 %v334, %v685
    %v687 = vpop.f32.mrb[0].mxu0
    %688 = vmatprep.mubr.bf16.mxu0 0
    %689 = vmatmul.mubr.bf16.gmra.mrb[0].mxu0 %v480
    %v690 = vpop.f32.mrb[0].mxu0
    %v691 = vadd.f32 %v334, %v690
    %v692 = vpop.f32.mrb[0].mxu0
    %v693 = vpop.f32.mrb[0].mxu0
    %v694 = vadd.f32 %v334, %v693
    %v695 = vpop.f32.mrb[0].mxu0
    %696 = vmatprep.mubr.bf16.mxu0 0
    %697 = vmatmul.mubr.bf16.gmra.mrb[0].mxu0 %v481
    %v698 = vpop.f32.mrb[0].mxu0
    %v699 = vadd.f32 %v334, %v698
    %v700 = vpop.f32.mrb[0].mxu0
    %v701 = vpop.f32.mrb[0].mxu0
    %v702 = vadd.f32 %v334, %v701
    %v703 = vpop.f32.mrb[0].mxu0
    %704 = vmatprep.mubr.bf16.mxu0 0
    %705 = vmatmul.mubr.bf16.gmra.mrb[0].mxu0 %v482
    %v706 = vpop.f32.mrb[0].mxu0
    %v707 = vadd.f32 %v334, %v706
    %v708 = vpop.f32.mrb[0].mxu0
    %v709 = vpop.f32.mrb[0].mxu0
    %v710 = vadd.f32 %v334, %v709
    %v711 = vpop.f32.mrb[0].mxu0
    %712 = vmatprep.mubr.bf16.mxu0 0
    %713 = vmatmul.mubr.bf16.gmra.mrb[0].mxu0 %v483
    %v714 = vpop.f32.mrb[0].mxu0
    %v715 = vadd.f32 %v334, %v714
    %v716 = vpop.f32.mrb[0].mxu0
    %v717 = vpop.f32.mrb[0].mxu0
    %v718 = vadd.f32 %v334, %v717
    %v719 = vpop.f32.mrb[0].mxu0
    %720 = vmatprep.mubr.bf16.mxu0 0
    %721 = vmatmul.mubr.bf16.gmra.mrb[0].mxu0 %v484
    %v722 = vpop.f32.mrb[0].mxu0
    %v723 = vadd.f32 %v334, %v722
    %v724 = vpop.f32.mrb[0].mxu0
    %v725 = vpop.f32.mrb[0].mxu0
    %v726 = vadd.f32 %v334, %v725
    %v727 = vpop.f32.mrb[0].mxu0
    %728 = vmatprep.mubr.bf16.mxu0 0
    %729 = vmatmul.mubr.bf16.gmra.mrb[0].mxu0 %v485
    %v730 = vpop.f32.mrb[0].mxu0
    %v731 = vadd.f32 %v334, %v730
    %v732 = vpop.f32.mrb[0].mxu0
    %v733 = vpop.f32.mrb[0].mxu0
    %v734 = vadd.f32 %v334, %v733
    %v735 = vpop.f32.mrb[0].mxu0
    %736 = vmatprep.mubr.bf16.mxu0 0
    %737 = vmatmul.mubr.bf16.gmra.mrb[0].mxu0 %v486
    %v738 = vpop.f32.mrb[0].mxu0
    %v739 = vadd.f32 %v334, %v738
    %v740 = vpop.f32.mrb[0].mxu0
    %v741 = vpop.f32.mrb[0].mxu0
    %v742 = vadd.f32 %v334, %v741
    %v743 = vpop.f32.mrb[0].mxu0
    %744 = vmatprep.mubr.bf16.mxu0 0
    %745 = vmatmul.mubr.bf16.gmra.mrb[0].mxu0 %v487
    %v746 = vpop.f32.mrb[0].mxu0
    %v747 = vadd.f32 %v334, %v746
    %v748 = vpop.f32.mrb[0].mxu0
    %v749 = vpop.f32.mrb[0].mxu0
    %v750 = vadd.f32 %v334, %v749
    %v751 = vpop.f32.mrb[0].mxu0
    %752 = vmatprep.mubr.bf16.mxu0 0
    %753 = vmatmul.mubr.bf16.gmra.mrb[0].mxu0 %v488
    %v754 = vpop.f32.mrb[0].mxu0
    %v755 = vadd.f32 %v334, %v754
    %v756 = vpop.f32.mrb[0].mxu0
    %v757 = vpop.f32.mrb[0].mxu0
    %v758 = vadd.f32 %v334, %v757
    %v759 = vpop.f32.mrb[0].mxu0
    %760 = vmatprep.mubr.bf16.mxu0 0
    %761 = vmatmul.mubr.bf16.gmra.mrb[0].mxu0 %v489
    %v762 = vpop.f32.mrb[0].mxu0
    %v763 = vadd.f32 %v334, %v762
    %v764 = vpop.f32.mrb[0].mxu0
    %v765 = vpop.f32.mrb[0].mxu0
    %v766 = vadd.f32 %v334, %v765
    %v767 = vpop.f32.mrb[0].mxu0
    %768 = vmatprep.mubr.bf16.mxu0 0
    %769 = vmatmul.mubr.bf16.gmra.mrb[0].mxu0 %v490
    %v770 = vpop.f32.mrb[0].mxu0
    %v771 = vadd.f32 %v334, %v770
    %v772 = vpop.f32.mrb[0].mxu0
    %v773 = vpop.f32.mrb[0].mxu0
    %v774 = vadd.f32 %v334, %v773
    %v775 = vpop.f32.mrb[0].mxu0
    %776 = vmatprep.mubr.bf16.mxu0 0
    %777 = vmatmul.mubr.bf16.gmra.mrb[0].mxu0 %v491
    %v778 = vpop.f32.mrb[0].mxu0
    %v779 = vadd.f32 %v334, %v778
    %v780 = vpop.f32.mrb[0].mxu0
    %v781 = vpop.f32.mrb[0].mxu0
    %v782 = vadd.f32 %v334, %v781
    %v783 = vpop.f32.mrb[0].mxu0
    %784 = vmatprep.mubr.bf16.mxu0 0
    %785 = vmatmul.mubr.bf16.gmra.mrb[0].mxu0 %v492
    %v786 = vpop.f32.mrb[0].mxu0
    %v787 = vadd.f32 %v334, %v786
    %v788 = vpop.f32.mrb[0].mxu0
    %v789 = vpop.f32.mrb[0].mxu0
    %v790 = vadd.f32 %v334, %v789
    %v791 = vpop.f32.mrb[0].mxu0
    %792 = vmatprep.mubr.bf16.mxu0 0
    %793 = vmatmul.mubr.bf16.gmra.mrb[0].mxu0 %v493
    %v794 = vpop.f32.mrb[0].mxu0
    %v795 = vadd.f32 %v334, %v794
    %v796 = vpop.f32.mrb[0].mxu0
    %v797 = vpop.f32.mrb[0].mxu0
    %v798 = vadd.f32 %v334, %v797
    %v799 = vpop.f32.mrb[0].mxu0
    %800 = vmatprep.mubr.bf16.mxu0 0
    %801 = vmatmul.mubr.bf16.gmra.mrb[0].mxu0 %v494
    %v802 = vpop.f32.mrb[0].mxu0
    %v803 = vadd.f32 %v334, %v802
    %v804 = vpop.f32.mrb[0].mxu0
    %v805 = vpop.f32.mrb[0].mxu0
    %v806 = vadd.f32 %v334, %v805
    %v807 = vpop.f32.mrb[0].mxu0
    %808 = vmatprep.mubr.bf16.mxu0 0
    %809 = vmatmul.mubr.bf16.gmra.mrb[0].mxu0 %v495
    %v810 = vpop.f32.mrb[0].mxu0
    %v811 = vadd.f32 %v334, %v810
    %v812 = vpop.f32.mrb[0].mxu0
    %v813 = vpop.f32.mrb[0].mxu0
    %v814 = vadd.f32 %v334, %v813
    %v815 = vpop.f32.mrb[0].mxu0
    %816 = vdwg.mxu0
    %817 = vst [vmem:[#allocation16] sm:$0xff] %v563
    %818 = vst [vmem:[#allocation16 + $0x8] sm:$0xff] %v566
    %819 = vst [vmem:[#allocation16 + $0x10] sm:$0xff] %v571
    %820 = vst [vmem:[#allocation16 + $0x18] sm:$0xff] %v574
    %821 = vst [vmem:[#allocation16 + $0x20] sm:$0xff] %v579
    %822 = vst [vmem:[#allocation16 + $0x28] sm:$0xff] %v582
    %823 = vst [vmem:[#allocation16 + $0x30] sm:$0xff] %v587
    %824 = vst [vmem:[#allocation16 + $0x38] sm:$0xff] %v590
    %825 = vst [vmem:[#allocation16 + $0x40] sm:$0xff] %v595
    %826 = vst [vmem:[#allocation16 + $0x48] sm:$0xff] %v598
    %827 = vst [vmem:[#allocation16 + $0x50] sm:$0xff] %v603
    %828 = vst [vmem:[#allocation16 + $0x58] sm:$0xff] %v606
    %829 = vst [vmem:[#allocation16 + $0x60] sm:$0xff] %v611
    %830 = vst [vmem:[#allocation16 + $0x68] sm:$0xff] %v614
    %831 = vst [vmem:[#allocation16 + $0x70] sm:$0xff] %v619
    %832 = vst [vmem:[#allocation16 + $0x78] sm:$0xff] %v622
    %833 = vst [vmem:[#allocation16 + $0x80] sm:$0xff] %v627
    %834 = vst [vmem:[#allocation16 + $0x88] sm:$0xff] %v630
    %835 = vst [vmem:[#allocation16 + $0x90] sm:$0xff] %v635
    %836 = vst [vmem:[#allocation16 + $0x98] sm:$0xff] %v638
    %837 = vst [vmem:[#allocation16 + $0xa0] sm:$0xff] %v643
    %838 = vst [vmem:[#allocation16 + $0xa8] sm:$0xff] %v646
    %839 = vst [vmem:[#allocation16 + $0xb0] sm:$0xff] %v651
    %840 = vst [vmem:[#allocation16 + $0xb8] sm:$0xff] %v654
    %841 = vst [vmem:[#allocation16 + $0xc0] sm:$0xff] %v659
    %842 = vst [vmem:[#allocation16 + $0xc8] sm:$0xff] %v662
    %843 = vst [vmem:[#allocation16 + $0xd0] sm:$0xff] %v667
    %844 = vst [vmem:[#allocation16 + $0xd8] sm:$0xff] %v670
    %845 = vst [vmem:[#allocation16 + $0xe0] sm:$0xff] %v675
    %846 = vst [vmem:[#allocation16 + $0xe8] sm:$0xff] %v678
    %847 = vst [vmem:[#allocation16 + $0xf0] sm:$0xff] %v683
    %848 = vst [vmem:[#allocation16 + $0xf8] sm:$0xff] %v686
    %849 = vst [vmem:[#allocation16 + $0x100] sm:$0xff] %v691
    %850 = vst [vmem:[#allocation16 + $0x108] sm:$0xff] %v694
    %851 = vst [vmem:[#allocation16 + $0x110] sm:$0xff] %v699
    %852 = vst [vmem:[#allocation16 + $0x118] sm:$0xff] %v702
    %853 = vst [vmem:[#allocation16 + $0x120] sm:$0xff] %v707
    %854 = vst [vmem:[#allocation16 + $0x128] sm:$0xff] %v710
    %855 = vst [vmem:[#allocation16 + $0x130] sm:$0xff] %v715
    %856 = vst [vmem:[#allocation16 + $0x138] sm:$0xff] %v718
    %857 = vst [vmem:[#allocation16 + $0x140] sm:$0xff] %v723
    %858 = vst [vmem:[#allocation16 + $0x148] sm:$0xff] %v726
    %859 = vst [vmem:[#allocation16 + $0x150] sm:$0xff] %v731
    %860 = vst [vmem:[#allocation16 + $0x158] sm:$0xff] %v734
    %861 = vst [vmem:[#allocation16 + $0x160] sm:$0xff] %v739
    %862 = vst [vmem:[#allocation16 + $0x168] sm:$0xff] %v742
    %863 = vst [vmem:[#allocation16 + $0x170] sm:$0xff] %v747
    %864 = vst [vmem:[#allocation16 + $0x178] sm:$0xff] %v750
    %865 = vst [vmem:[#allocation16 + $0x180] sm:$0xff] %v755
    %866 = vst [vmem:[#allocation16 + $0x188] sm:$0xff] %v758
    %867 = vst [vmem:[#allocation16 + $0x190] sm:$0xff] %v763
    %868 = vst [vmem:[#allocation16 + $0x198] sm:$0xff] %v766
    %869 = vst [vmem:[#allocation16 + $0x1a0] sm:$0xff] %v771
    %870 = vst [vmem:[#allocation16 + $0x1a8] sm:$0xff] %v774
    %871 = vst [vmem:[#allocation16 + $0x1b0] sm:$0xff] %v779
    %872 = vst [vmem:[#allocation16 + $0x1b8] sm:$0xff] %v782
    %873 = vst [vmem:[#allocation16 + $0x1c0] sm:$0xff] %v787
    %874 = vst [vmem:[#allocation16 + $0x1c8] sm:$0xff] %v790
    %875 = vst [vmem:[#allocation16 + $0x1d0] sm:$0xff] %v795
    %876 = vst [vmem:[#allocation16 + $0x1d8] sm:$0xff] %v798
    %877 = vst [vmem:[#allocation16 + $0x1e0] sm:$0xff] %v803
    %878 = vst [vmem:[#allocation16 + $0x1e8] sm:$0xff] %v806
    %879 = vst [vmem:[#allocation16 + $0x1f0] sm:$0xff] %v811
    %880 = vst [vmem:[#allocation16 + $0x1f8] sm:$0xff] %v814
    // Predicated region
    $region62: #{tpu_custom_call.1} parent=1 // pred_check
      _
    $region63: #{tpu_custom_call.1} parent=1 // pred_check_branch
      %882 = sbr.rel (0) target = $region65
    $region64: #{tpu_custom_call.1} parent=1 // pred_region
      %s884 = ssub.s32 8192, 8192
      %885 = vsyncadd [#allocation6], %s884
      %s886 = sshll.u32 [#allocation16], 4
      %s887 = int_to_ptr.vmem [resolvable:$true] %s886
      %892 = dma.vmem_to_hbm [thread:$0]  %s887, 8192, %s7, [#allocation6], 128, 128, 8
    $region65: #{tpu_custom_call.1} parent=1 // pred_fallthru
      _
    // Predicated region
    $region66: #{tpu_custom_call.1} parent=1 // pred_check
      _
    $region67: #{tpu_custom_call.1} parent=1 // pred_check_branch
      %894 = sbr.rel (0) target = $region69
    $region68: #{tpu_custom_call.1} parent=1 // pred_region
      %895 = dma.done [#allocation6], 8192
    $region69: #{tpu_custom_call.1} parent=1 // pred_fallthru
      _
    %896 = vsyncpa [#allocation5], 1
    %897 = vsyncpa [#allocation8], 1
    %898 = vsyncpa [#allocation11], 1
    %899 = vsyncpa [#allocation14], 1
    %900 = vsyncpa [#allocation6], 1

</llo_original>
